<compile_context>
chip_gen: v5e
topology: v5e:2x2
jax: 0.10.0
libtpu: 0.0.40
codegen_flags: <defaults>
</compile_context>

<pallas_src>
import functools

import jax
import jax.numpy as jnp
from jax import lax
from jax.experimental import pallas as pl
from jax.experimental.pallas import tpu as pltpu


# ----------------------------- context-window glue (same semantics as the PyTorch helpers) ---
def contextwin(l, win):
    assert win % 2 == 1 and win >= 1
    l = list(l)
    lpadded = (win // 2) * [0] + l + (win // 2) * [0]
    out = [lpadded[i:i + win] for i in range(len(l))]
    assert len(out) == len(l)
    return out


def contextwin_2(ls, win):
    return [contextwin(l, win) for l in ls]


# ----------------------------- Pallas kernel --------------------------------------------------
def drnn_kernel(x_ref, wih1_ref, b1_ref, wrec_ref, wih2_ref, b2_ref,
                whead_ref, bhead_ref, out_ref, hist_ref, *, seq_len, bp):
    """Two stacked tanh-RNNs + both linear heads, fully in-kernel.

    x_ref    : (T*Bp, D)        bf16, time-major, batch padded to an 8-row sublane granule
    wih1_ref : (D, H1)          bf16  RNN1 input weights (pre-transposed)
    b1_ref   : (1, H1)          f32   RNN1 folded bias (b_ih + b_hh)
    wrec_ref : (H1+H2, H1+H2)   bf16  block-diag [[W_hh1, 0], [0, W_hh2]]
    wih2_ref : (H1, H2)         bf16  RNN2 input weights
    b2_ref   : (1, H2)          f32   RNN2 folded bias
    whead_ref: (H1+H2, O1+O2)   bf16  block-diag [[W_l1, 0], [0, W_l2]]
    bhead_ref: (1, O1+O2)       f32   [b_l1 | b_l2]
    out_ref  : (T*Bp, O1+O2)    f32   merged head outputs (row t*Bp + b)
    hist_ref : (T*Bp, H1+H2)    f32   VMEM scratch: merged hidden history [h1 | h2]
    """
    T, B = seq_len, bp
    H1 = wih1_ref.shape[1]
    H2 = wih2_ref.shape[1]
    H = H1 + H2

    # ---- hoisted out of the serial time loop --------------------------------------------
    # State-independent RNN1 input projection: ONE bulk MXU matmul, bias folded in.
    xp = (jnp.dot(x_ref[...], wih1_ref[...], preferred_element_type=jnp.float32)
          + b1_ref[...])                                        # (T*Bp, H1) f32
    wrec = wrec_ref[...]                                        # (H, H)  bf16
    wih2 = wih2_ref[...]                                        # (H1,H2) bf16
    b2 = jnp.broadcast_to(b2_ref[...], (B, H2))                 # broadcast once, not per step

    # Joint state [h1 | h2]; zero initial state (init_state). bf16 = MXU operand dtype.
    s = jnp.zeros((B, H), jnp.bfloat16)

    # Fully unrolled time loop (T is a compile-time constant): static, sublane-aligned offsets
    # (Bp multiple of 8); 2 MXU pushes per step, no concat/select on the serial chain.
    for t in range(T):
        r0 = t * B
        # Both layers' recurrent terms in ONE block-diagonal MXU push, issued at step start.
        rec = jnp.dot(s, wrec, preferred_element_type=jnp.float32)          # (B, H) f32
        # RNN1: h1_t = tanh((x_t W_ih1 + b1) + h1_{t-1} W_hh1)   (elementwise stays f32: v5e)
        h1 = jnp.tanh(xp[r0:r0 + B, :] + rec[:, :H1])
        # RNN2: h2_t = tanh(h1_t W_ih2 + b2 + h2_{t-1} W_hh2)               -- 1 MXU push
        h2 = jnp.tanh(jnp.dot(h1.astype(jnp.bfloat16), wih2,
                              preferred_element_type=jnp.float32) + b2 + rec[:, H1:])
        # Merged, sublane-aligned history writes; the joint next state is read back from the
        # 64-lane row block instead of materializing a per-step XLU lane concat.
        hist_ref[r0:r0 + B, 0:H1] = h1
        hist_ref[r0:r0 + B, H1:H] = h2
        s = hist_ref[r0:r0 + B, :].astype(jnp.bfloat16)

    # ---- epilogue: both linear heads as ONE bulk matmul (block-diag weight, folded biases);
    # the hidden histories never leave VMEM.
    out_ref[...] = (jnp.dot(hist_ref[...].astype(jnp.bfloat16), whead_ref[...],
                            preferred_element_type=jnp.float32) + bhead_ref[...])


# ----------------------------- parameter packing (done once, outside jit) --------------------
def _block_diag(a, b):
    h1, o1 = a.shape
    h2, o2 = b.shape
    return jnp.concatenate(
        [jnp.concatenate([a, jnp.zeros((h1, o2), a.dtype)], axis=1),
         jnp.concatenate([jnp.zeros((h2, o1), b.dtype), b], axis=1)], axis=0)


def prepare_kernel_params(params):
    """Pack torch-layout parameters into the kernel layout once:
       biases folded (b_ih + b_hh), recurrent + head weights block-diagonal, MXU operands bf16."""
    bf = jnp.bfloat16
    wih1 = params["wih1"].astype(bf)
    b1 = params["bih1"] + params["bhh1"]
    wrec = _block_diag(params["whh1"], params["whh2"]).astype(bf)
    wih2 = params["wih2"].astype(bf)
    b2 = params["bih2"] + params["bhh2"]
    whead = _block_diag(params["wl1"], params["wl2"]).astype(bf)
    bhead = jnp.concatenate([params["bl1"], params["bl2"]], axis=1)
    return (wih1, b1, wrec, wih2, b2, whead, bhead)


# ----------------------------- wrapper --------------------------------------------------------
@functools.partial(jax.jit, static_argnames=("batch", "out1"))
def drnn_forward(x_tm, kp, *, batch, out1):
    """x_tm: (T, Bp, D) f32, time-major, batch padded to a multiple of 8 sublanes.
    Returns (y, z) batch-first like the PyTorch module: (B, T, O1), (B, T, O2)."""
    T, Bp, D = x_tm.shape
    wih1, b1, wrec, wih2, b2, whead, bhead = kp
    H1 = wih1.shape[1]
    H2 = wih2.shape[1]
    O = whead.shape[1]

    x_flat = x_tm.reshape(T * Bp, D).astype(jnp.bfloat16)       # bf16 MXU operand

    vmem = pl.BlockSpec(memory_space=pltpu.MemorySpace.VMEM)
    kernel = functools.partial(drnn_kernel, seq_len=T, bp=Bp)
    # Gridless / single-TensorCore: all operands are a few KB and fully VMEM-resident.
    # TODO(synk): if T/B/H scale up, add a ("parallel",) batch grid axis (engages v7x's 2nd TC
    # once a batch tile is ~256 rows) and budget the (T*Bp, H1+H2) history scratch against
    # v7x's 64 MiB VMEM rather than 128 MiB.
    out_flat = pl.pallas_call(
        kernel,
        out_shape=jax.ShapeDtypeStruct((T * Bp, O), jnp.float32),
        in_specs=[vmem] * 8,
        out_specs=vmem,
        scratch_shapes=[pltpu.VMEM((T * Bp, H1 + H2), jnp.float32)],
    )(x_flat, wih1, b1, wrec, wih2, b2, whead, bhead)

    out = out_flat.reshape(T, Bp, O)[:, :batch, :]              # drop pad rows
    y = jnp.transpose(out[..., :out1], (1, 0, 2))               # (B, T, O1)
    z = jnp.transpose(out[..., out1:], (1, 0, 2))               # (B, T, O2)
    return y, z


# ----------------------------- pure-JAX references for validation ----------------------------
def drnn_reference(x_tbd, params, *, bf16_operands=False, precision=None):
    """UNGROUPED reference of the module forward (torch nn.RNN semantics):
        h_t = tanh(x_t W_ih + b_ih + h_{t-1} W_hh + b_hh), stacked twice, then two Linear heads.
    bf16_operands=True applies the same matmul-operand quantization as the kernel (tight check
    of the folding / block-diag / fused-head algebra); False + precision=HIGHEST is the full-f32
    torch-accurate baseline. x_tbd is time-major (T, B, D); outputs are batch-first."""
    B = x_tbd.shape[1]
    H1 = params["whh1"].shape[0]
    H2 = params["whh2"].shape[0]

    def mm(a, w):
        if bf16_operands:
            a = a.astype(jnp.bfloat16)
            w = w.astype(jnp.bfloat16)
        return jnp.dot(a, w, preferred_element_type=jnp.float32, precision=precision)

    def step(carry, x_t):
        h1, h2 = carry
        h1 = jnp.tanh(mm(x_t, params["wih1"]) + params["bih1"]
                      + mm(h1, params["whh1"]) + params["bhh1"])
        h2 = jnp.tanh(mm(h1, params["wih2"]) + params["bih2"]
                      + mm(h2, params["whh2"]) + params["bhh2"])
        return (h1, h2), (h1, h2)

    h0 = (jnp.zeros((B, H1), jnp.float32), jnp.zeros((B, H2), jnp.float32))
    _, (h1s, h2s) = lax.scan(step, h0, x_tbd)                   # (T, B, H)

    def head(h, w, b):
        t, bsz, hh = h.shape
        o = (mm(h.reshape(t * bsz, hh), w) + b).reshape(t, bsz, -1)
        return jnp.transpose(o, (1, 0, 2))                      # batch-first

    return head(h1s, params["wl1"], params["bl1"]), head(h2s, params["wl2"], params["bl2"])


# ----------------------------- main -----------------------------------------------------------
if __name__ == "__main__":
    # Shapes implied by the module's forward:
    #   win = 3, emb_dim = 8 -> inputsize1 = 24 (RNN1 in); hiddensize1 = hiddensize2 = inchanle
    #   = inputsize (RNN2 in) = 32; outchanle1 = 5, outchanle2 = 7; batchsize = 2, seq_len = 8.
    vocab, emb_dim, win = 50, 8, 3
    B, T = 2, 8
    D = win * emb_dim                    # 24
    H1 = H2 = 32
    O1, O2 = 5, 7
    Bp = max(8, ((B + 7) // 8) * 8)      # sublane-aligned padded batch (8)

    key = jax.random.PRNGKey(0)
    keys = jax.random.split(key, 16)

    def init(k, shape, fan_in):
        return jax.random.normal(k, shape, jnp.float32) / jnp.sqrt(jnp.float32(fan_in))

    embw = init(keys[0], (vocab, emb_dim), emb_dim)
    params = {
        # torch nn.RNN / nn.Linear parameters, stored pre-transposed as (in, out); the ih/hh
        # biases are kept separate so the reference follows the ungrouped torch accumulation.
        "wih1": init(keys[1], (D, H1), D),
        "whh1": init(keys[2], (H1, H1), H1),
        "bih1": init(keys[3], (1, H1), H1),
        "bhh1": init(keys[4], (1, H1), H1),
        "wih2": init(keys[5], (H1, H2), H1),
        "whh2": init(keys[6], (H2, H2), H2),
        "bih2": init(keys[7], (1, H2), H2),
        "bhh2": init(keys[8], (1, H2), H2),
        "wl1":  init(keys[9], (H1, O1), H1),
        "bl1":  init(keys[10], (1, O1), O1),
        "wl2":  init(keys[11], (H2, O2), H2),
        "bl2":  init(keys[12], (1, O2), O2),
    }

    # Token-id input: B sequences of length T (like the module's `inputs`).
    tok = jax.random.randint(keys[13], (B, T), 0, vocab, jnp.int32)
    tok_lists = [list(map(int, row)) for row in jax.device_get(tok)]

    # Context windows built time-major and batch-padded in Python so ONE embedding gather emits
    # the kernel's (T, Bp, D) layout directly (no separate transpose / pad / copy ops).
    ctx = contextwin_2(tok_lists, win)                                       # B x T x win
    ctx_tm = [[ctx[b][t] if b < B else [0] * win for b in range(Bp)] for t in range(T)]
    win_idx = jnp.asarray(ctx_tm, dtype=jnp.int32)                           # (T, Bp, win)
    x_tm = jnp.take(embw, win_idx, axis=0).reshape(T, Bp, D)                 # (T, Bp, 24) f32
    # TODO(synk): nn.Dropout(0.5) treated as identity (inference mode); no RNG dropout applied.

    kp = prepare_kernel_params(params)
    y, z = drnn_forward(x_tm, kp, batch=B, out1=O1)
    jax.block_until_ready((y, z))
    assert y.shape == (B, T, O1) and z.shape == (B, T, O2)

    x_valid = x_tm[:, :B, :]
    # Tight structural check: ungrouped torch-ordered reference sharing only the bf16 operand
    # quantization with the kernel -> validates bias folding / block-diag / fused-head algebra.
    y_t, z_t = drnn_reference(x_valid, params, bf16_operands=True)
    assert jnp.allclose(y, y_t, atol=1e-4, rtol=1e-4)
    assert jnp.allclose(z, z_t, atol=1e-4, rtol=1e-4)
    # Loose sanity check vs the full-f32 HIGHEST-precision ungrouped reference: bounds the bf16
    # MXU-operand quantization drift accumulated over the 8-step recurrence.
    y_f, z_f = drnn_reference(x_valid, params, bf16_operands=False,
                              precision=jax.lax.Precision.HIGHEST)
    assert jnp.allclose(y, y_f, atol=2e-1, rtol=2e-1)
    assert jnp.allclose(z, z_f, atol=2e-1, rtol=2e-1)

    print("KERNEL_OK")
</pallas_src>

<mosaic_0001>
module attributes {stable_mosaic.version = 11 : i64} {
  func.func @drnn_kernel(%arg0: memref<64x24xbf16, #tpu.memory_space<vmem>>, %arg1: memref<24x32xbf16, #tpu.memory_space<vmem>>, %arg2: memref<1x32xf32, #tpu.memory_space<vmem>>, %arg3: memref<64x64xbf16, #tpu.memory_space<vmem>>, %arg4: memref<32x32xbf16, #tpu.memory_space<vmem>>, %arg5: memref<1x32xf32, #tpu.memory_space<vmem>>, %arg6: memref<64x12xbf16, #tpu.memory_space<vmem>>, %arg7: memref<1x12xf32, #tpu.memory_space<vmem>>, %arg8: memref<64x12xf32, #tpu.memory_space<vmem>>, %arg9: memref<64x64xf32, #tpu.memory_space<vmem>>) attributes {dimension_semantics = [], scalar_prefetch = 0 : i64, scratch_operands = 1 : i64, tpu.core_type = #tpu.core_type<tc>} {
    %c0 = arith.constant 0 : index
    %c0_0 = arith.constant 0 : index
    %0 = vector.load %arg0[%c0, %c0_0] : memref<64x24xbf16, #tpu.memory_space<vmem>>, vector<64x24xbf16>
    %c0_1 = arith.constant 0 : index
    %c0_2 = arith.constant 0 : index
    %1 = vector.load %arg1[%c0_1, %c0_2] : memref<24x32xbf16, #tpu.memory_space<vmem>>, vector<24x32xbf16>
    %cst = arith.constant dense<0.000000e+00> : vector<64x32xf32>
    %2 = tpu.matmul %0, %1, %cst {dimension_numbers = #tpu.dot_dimension_numbers<[1], [0], [0], [1], [0, 0, 1, 1], [], []>} : vector<64x24xbf16>, vector<24x32xbf16>, vector<64x32xf32> -> vector<64x32xf32>
    %c0_3 = arith.constant 0 : index
    %c0_4 = arith.constant 0 : index
    %3 = vector.load %arg2[%c0_3, %c0_4] : memref<1x32xf32, #tpu.memory_space<vmem>>, vector<1x32xf32>
    %4 = vector.broadcast %3 : vector<1x32xf32> to vector<64x32xf32>
    %5 = arith.addf %2, %4 : vector<64x32xf32>
    %c0_5 = arith.constant 0 : index
    %c0_6 = arith.constant 0 : index
    %6 = vector.load %arg3[%c0_5, %c0_6] : memref<64x64xbf16, #tpu.memory_space<vmem>>, vector<64x64xbf16>
    %c0_7 = arith.constant 0 : index
    %c0_8 = arith.constant 0 : index
    %7 = vector.load %arg4[%c0_7, %c0_8] : memref<32x32xbf16, #tpu.memory_space<vmem>>, vector<32x32xbf16>
    %c0_9 = arith.constant 0 : index
    %c0_10 = arith.constant 0 : index
    %8 = vector.load %arg5[%c0_9, %c0_10] : memref<1x32xf32, #tpu.memory_space<vmem>>, vector<1x32xf32>
    %9 = vector.shape_cast %8 : vector<1x32xf32> to vector<1x32xf32>
    %10 = vector.broadcast %9 : vector<1x32xf32> to vector<8x32xf32>
    %cst_11 = arith.constant 0.000000e+00 : bf16
    %11 = vector.broadcast %cst_11 : bf16 to vector<8x64xbf16>
    %cst_12 = arith.constant dense<0.000000e+00> : vector<8x64xf32>
    %12 = tpu.matmul %11, %6, %cst_12 {dimension_numbers = #tpu.dot_dimension_numbers<[1], [0], [0], [1], [0, 0, 1, 1], [], []>} : vector<8x64xbf16>, vector<64x64xbf16>, vector<8x64xf32> -> vector<8x64xf32>
    %13 = vector.extract_strided_slice %5 {offsets = [0, 0], sizes = [8, 32], strides = [1, 1]} : vector<64x32xf32> to vector<8x32xf32>
    %14 = vector.extract_strided_slice %12 {offsets = [0, 0], sizes = [8, 32], strides = [1, 1]} : vector<8x64xf32> to vector<8x32xf32>
    %15 = arith.addf %13, %14 : vector<8x32xf32>
    %16 = math.tanh %15 : vector<8x32xf32>
    %17 = arith.truncf %16 : vector<8x32xf32> to vector<8x32xbf16>
    %cst_13 = arith.constant dense<0.000000e+00> : vector<8x32xf32>
    %18 = tpu.matmul %17, %7, %cst_13 {dimension_numbers = #tpu.dot_dimension_numbers<[1], [0], [0], [1], [0, 0, 1, 1], [], []>} : vector<8x32xbf16>, vector<32x32xbf16>, vector<8x32xf32> -> vector<8x32xf32>
    %19 = arith.addf %18, %10 : vector<8x32xf32>
    %20 = vector.extract_strided_slice %12 {offsets = [0, 32], sizes = [8, 32], strides = [1, 1]} : vector<8x64xf32> to vector<8x32xf32>
    %21 = arith.addf %19, %20 : vector<8x32xf32>
    %22 = math.tanh %21 : vector<8x32xf32>
    %c0_14 = arith.constant 0 : index
    %c0_15 = arith.constant 0 : index
    %23 = vector.load %arg9[%c0_14, %c0_15] : memref<64x64xf32, #tpu.memory_space<vmem>>, vector<8x32xf32>
    tpu.vector_store %arg9[%c0_14, %c0_15], %16 {strides = array<i32>} : memref<64x64xf32, #tpu.memory_space<vmem>>, vector<8x32xf32>,
    %c0_16 = arith.constant 0 : index
    %c32 = arith.constant 32 : index
    %24 = vector.load %arg9[%c0_16, %c32] : memref<64x64xf32, #tpu.memory_space<vmem>>, vector<8x32xf32>
    tpu.vector_store %arg9[%c0_16, %c32], %22 {strides = array<i32>} : memref<64x64xf32, #tpu.memory_space<vmem>>, vector<8x32xf32>,
    %c0_17 = arith.constant 0 : index
    %c0_18 = arith.constant 0 : index
    %25 = vector.load %arg9[%c0_17, %c0_18] : memref<64x64xf32, #tpu.memory_space<vmem>>, vector<8x64xf32>
    %26 = arith.truncf %25 : vector<8x64xf32> to vector<8x64xbf16>
    %cst_19 = arith.constant dense<0.000000e+00> : vector<8x64xf32>
    %27 = tpu.matmul %26, %6, %cst_19 {dimension_numbers = #tpu.dot_dimension_numbers<[1], [0], [0], [1], [0, 0, 1, 1], [], []>} : vector<8x64xbf16>, vector<64x64xbf16>, vector<8x64xf32> -> vector<8x64xf32>
    %28 = vector.extract_strided_slice %5 {offsets = [8, 0], sizes = [8, 32], strides = [1, 1]} : vector<64x32xf32> to vector<8x32xf32>
    %29 = vector.extract_strided_slice %27 {offsets = [0, 0], sizes = [8, 32], strides = [1, 1]} : vector<8x64xf32> to vector<8x32xf32>
    %30 = arith.addf %28, %29 : vector<8x32xf32>
    %31 = math.tanh %30 : vector<8x32xf32>
    %32 = arith.truncf %31 : vector<8x32xf32> to vector<8x32xbf16>
    %cst_20 = arith.constant dense<0.000000e+00> : vector<8x32xf32>
    %33 = tpu.matmul %32, %7, %cst_20 {dimension_numbers = #tpu.dot_dimension_numbers<[1], [0], [0], [1], [0, 0, 1, 1], [], []>} : vector<8x32xbf16>, vector<32x32xbf16>, vector<8x32xf32> -> vector<8x32xf32>
    %34 = arith.addf %33, %10 : vector<8x32xf32>
    %35 = vector.extract_strided_slice %27 {offsets = [0, 32], sizes = [8, 32], strides = [1, 1]} : vector<8x64xf32> to vector<8x32xf32>
    %36 = arith.addf %34, %35 : vector<8x32xf32>
    %37 = math.tanh %36 : vector<8x32xf32>
    %c8 = arith.constant 8 : index
    %c0_21 = arith.constant 0 : index
    %38 = vector.load %arg9[%c8, %c0_21] : memref<64x64xf32, #tpu.memory_space<vmem>>, vector<8x32xf32>
    tpu.vector_store %arg9[%c8, %c0_21], %31 {strides = array<i32>} : memref<64x64xf32, #tpu.memory_space<vmem>>, vector<8x32xf32>,
    %c8_22 = arith.constant 8 : index
    %c32_23 = arith.constant 32 : index
    %39 = vector.load %arg9[%c8_22, %c32_23] : memref<64x64xf32, #tpu.memory_space<vmem>>, vector<8x32xf32>
    tpu.vector_store %arg9[%c8_22, %c32_23], %37 {strides = array<i32>} : memref<64x64xf32, #tpu.memory_space<vmem>>, vector<8x32xf32>,
    %c8_24 = arith.constant 8 : index
    %c0_25 = arith.constant 0 : index
    %40 = vector.load %arg9[%c8_24, %c0_25] : memref<64x64xf32, #tpu.memory_space<vmem>>, vector<8x64xf32>
    %41 = arith.truncf %40 : vector<8x64xf32> to vector<8x64xbf16>
    %cst_26 = arith.constant dense<0.000000e+00> : vector<8x64xf32>
    %42 = tpu.matmul %41, %6, %cst_26 {dimension_numbers = #tpu.dot_dimension_numbers<[1], [0], [0], [1], [0, 0, 1, 1], [], []>} : vector<8x64xbf16>, vector<64x64xbf16>, vector<8x64xf32> -> vector<8x64xf32>
    %43 = vector.extract_strided_slice %5 {offsets = [16, 0], sizes = [8, 32], strides = [1, 1]} : vector<64x32xf32> to vector<8x32xf32>
    %44 = vector.extract_strided_slice %42 {offsets = [0, 0], sizes = [8, 32], strides = [1, 1]} : vector<8x64xf32> to vector<8x32xf32>
    %45 = arith.addf %43, %44 : vector<8x32xf32>
    %46 = math.tanh %45 : vector<8x32xf32>
    %47 = arith.truncf %46 : vector<8x32xf32> to vector<8x32xbf16>
    %cst_27 = arith.constant dense<0.000000e+00> : vector<8x32xf32>
    %48 = tpu.matmul %47, %7, %cst_27 {dimension_numbers = #tpu.dot_dimension_numbers<[1], [0], [0], [1], [0, 0, 1, 1], [], []>} : vector<8x32xbf16>, vector<32x32xbf16>, vector<8x32xf32> -> vector<8x32xf32>
    %49 = arith.addf %48, %10 : vector<8x32xf32>
    %50 = vector.extract_strided_slice %42 {offsets = [0, 32], sizes = [8, 32], strides = [1, 1]} : vector<8x64xf32> to vector<8x32xf32>
    %51 = arith.addf %49, %50 : vector<8x32xf32>
    %52 = math.tanh %51 : vector<8x32xf32>
    %c16 = arith.constant 16 : index
    %c0_28 = arith.constant 0 : index
    %53 = vector.load %arg9[%c16, %c0_28] : memref<64x64xf32, #tpu.memory_space<vmem>>, vector<8x32xf32>
    tpu.vector_store %arg9[%c16, %c0_28], %46 {strides = array<i32>} : memref<64x64xf32, #tpu.memory_space<vmem>>, vector<8x32xf32>,
    %c16_29 = arith.constant 16 : index
    %c32_30 = arith.constant 32 : index
    %54 = vector.load %arg9[%c16_29, %c32_30] : memref<64x64xf32, #tpu.memory_space<vmem>>, vector<8x32xf32>
    tpu.vector_store %arg9[%c16_29, %c32_30], %52 {strides = array<i32>} : memref<64x64xf32, #tpu.memory_space<vmem>>, vector<8x32xf32>,
    %c16_31 = arith.constant 16 : index
    %c0_32 = arith.constant 0 : index
    %55 = vector.load %arg9[%c16_31, %c0_32] : memref<64x64xf32, #tpu.memory_space<vmem>>, vector<8x64xf32>
    %56 = arith.truncf %55 : vector<8x64xf32> to vector<8x64xbf16>
    %cst_33 = arith.constant dense<0.000000e+00> : vector<8x64xf32>
    %57 = tpu.matmul %56, %6, %cst_33 {dimension_numbers = #tpu.dot_dimension_numbers<[1], [0], [0], [1], [0, 0, 1, 1], [], []>} : vector<8x64xbf16>, vector<64x64xbf16>, vector<8x64xf32> -> vector<8x64xf32>
    %58 = vector.extract_strided_slice %5 {offsets = [24, 0], sizes = [8, 32], strides = [1, 1]} : vector<64x32xf32> to vector<8x32xf32>
    %59 = vector.extract_strided_slice %57 {offsets = [0, 0], sizes = [8, 32], strides = [1, 1]} : vector<8x64xf32> to vector<8x32xf32>
    %60 = arith.addf %58, %59 : vector<8x32xf32>
    %61 = math.tanh %60 : vector<8x32xf32>
    %62 = arith.truncf %61 : vector<8x32xf32> to vector<8x32xbf16>
    %cst_34 = arith.constant dense<0.000000e+00> : vector<8x32xf32>
    %63 = tpu.matmul %62, %7, %cst_34 {dimension_numbers = #tpu.dot_dimension_numbers<[1], [0], [0], [1], [0, 0, 1, 1], [], []>} : vector<8x32xbf16>, vector<32x32xbf16>, vector<8x32xf32> -> vector<8x32xf32>
    %64 = arith.addf %63, %10 : vector<8x32xf32>
    %65 = vector.extract_strided_slice %57 {offsets = [0, 32], sizes = [8, 32], strides = [1, 1]} : vector<8x64xf32> to vector<8x32xf32>
    %66 = arith.addf %64, %65 : vector<8x32xf32>
    %67 = math.tanh %66 : vector<8x32xf32>
    %c24 = arith.constant 24 : index
    %c0_35 = arith.constant 0 : index
    %68 = vector.load %arg9[%c24, %c0_35] : memref<64x64xf32, #tpu.memory_space<vmem>>, vector<8x32xf32>
    tpu.vector_store %arg9[%c24, %c0_35], %61 {strides = array<i32>} : memref<64x64xf32, #tpu.memory_space<vmem>>, vector<8x32xf32>,
    %c24_36 = arith.constant 24 : index
    %c32_37 = arith.constant 32 : index
    %69 = vector.load %arg9[%c24_36, %c32_37] : memref<64x64xf32, #tpu.memory_space<vmem>>, vector<8x32xf32>
    tpu.vector_store %arg9[%c24_36, %c32_37], %67 {strides = array<i32>} : memref<64x64xf32, #tpu.memory_space<vmem>>, vector<8x32xf32>,
    %c24_38 = arith.constant 24 : index
    %c0_39 = arith.constant 0 : index
    %70 = vector.load %arg9[%c24_38, %c0_39] : memref<64x64xf32, #tpu.memory_space<vmem>>, vector<8x64xf32>
    %71 = arith.truncf %70 : vector<8x64xf32> to vector<8x64xbf16>
    %cst_40 = arith.constant dense<0.000000e+00> : vector<8x64xf32>
    %72 = tpu.matmul %71, %6, %cst_40 {dimension_numbers = #tpu.dot_dimension_numbers<[1], [0], [0], [1], [0, 0, 1, 1], [], []>} : vector<8x64xbf16>, vector<64x64xbf16>, vector<8x64xf32> -> vector<8x64xf32>
    %73 = vector.extract_strided_slice %5 {offsets = [32, 0], sizes = [8, 32], strides = [1, 1]} : vector<64x32xf32> to vector<8x32xf32>
    %74 = vector.extract_strided_slice %72 {offsets = [0, 0], sizes = [8, 32], strides = [1, 1]} : vector<8x64xf32> to vector<8x32xf32>
    %75 = arith.addf %73, %74 : vector<8x32xf32>
    %76 = math.tanh %75 : vector<8x32xf32>
    %77 = arith.truncf %76 : vector<8x32xf32> to vector<8x32xbf16>
    %cst_41 = arith.constant dense<0.000000e+00> : vector<8x32xf32>
    %78 = tpu.matmul %77, %7, %cst_41 {dimension_numbers = #tpu.dot_dimension_numbers<[1], [0], [0], [1], [0, 0, 1, 1], [], []>} : vector<8x32xbf16>, vector<32x32xbf16>, vector<8x32xf32> -> vector<8x32xf32>
    %79 = arith.addf %78, %10 : vector<8x32xf32>
    %80 = vector.extract_strided_slice %72 {offsets = [0, 32], sizes = [8, 32], strides = [1, 1]} : vector<8x64xf32> to vector<8x32xf32>
    %81 = arith.addf %79, %80 : vector<8x32xf32>
    %82 = math.tanh %81 : vector<8x32xf32>
    %c32_42 = arith.constant 32 : index
    %c0_43 = arith.constant 0 : index
    %83 = vector.load %arg9[%c32_42, %c0_43] : memref<64x64xf32, #tpu.memory_space<vmem>>, vector<8x32xf32>
    tpu.vector_store %arg9[%c32_42, %c0_43], %76 {strides = array<i32>} : memref<64x64xf32, #tpu.memory_space<vmem>>, vector<8x32xf32>,
    %c32_44 = arith.constant 32 : index
    %c32_45 = arith.constant 32 : index
    %84 = vector.load %arg9[%c32_44, %c32_45] : memref<64x64xf32, #tpu.memory_space<vmem>>, vector<8x32xf32>
    tpu.vector_store %arg9[%c32_44, %c32_45], %82 {strides = array<i32>} : memref<64x64xf32, #tpu.memory_space<vmem>>, vector<8x32xf32>,
    %c32_46 = arith.constant 32 : index
    %c0_47 = arith.constant 0 : index
    %85 = vector.load %arg9[%c32_46, %c0_47] : memref<64x64xf32, #tpu.memory_space<vmem>>, vector<8x64xf32>
    %86 = arith.truncf %85 : vector<8x64xf32> to vector<8x64xbf16>
    %cst_48 = arith.constant dense<0.000000e+00> : vector<8x64xf32>
    %87 = tpu.matmul %86, %6, %cst_48 {dimension_numbers = #tpu.dot_dimension_numbers<[1], [0], [0], [1], [0, 0, 1, 1], [], []>} : vector<8x64xbf16>, vector<64x64xbf16>, vector<8x64xf32> -> vector<8x64xf32>
    %88 = vector.extract_strided_slice %5 {offsets = [40, 0], sizes = [8, 32], strides = [1, 1]} : vector<64x32xf32> to vector<8x32xf32>
    %89 = vector.extract_strided_slice %87 {offsets = [0, 0], sizes = [8, 32], strides = [1, 1]} : vector<8x64xf32> to vector<8x32xf32>
    %90 = arith.addf %88, %89 : vector<8x32xf32>
    %91 = math.tanh %90 : vector<8x32xf32>
    %92 = arith.truncf %91 : vector<8x32xf32> to vector<8x32xbf16>
    %cst_49 = arith.constant dense<0.000000e+00> : vector<8x32xf32>
    %93 = tpu.matmul %92, %7, %cst_49 {dimension_numbers = #tpu.dot_dimension_numbers<[1], [0], [0], [1], [0, 0, 1, 1], [], []>} : vector<8x32xbf16>, vector<32x32xbf16>, vector<8x32xf32> -> vector<8x32xf32>
    %94 = arith.addf %93, %10 : vector<8x32xf32>
    %95 = vector.extract_strided_slice %87 {offsets = [0, 32], sizes = [8, 32], strides = [1, 1]} : vector<8x64xf32> to vector<8x32xf32>
    %96 = arith.addf %94, %95 : vector<8x32xf32>
    %97 = math.tanh %96 : vector<8x32xf32>
    %c40 = arith.constant 40 : index
    %c0_50 = arith.constant 0 : index
    %98 = vector.load %arg9[%c40, %c0_50] : memref<64x64xf32, #tpu.memory_space<vmem>>, vector<8x32xf32>
    tpu.vector_store %arg9[%c40, %c0_50], %91 {strides = array<i32>} : memref<64x64xf32, #tpu.memory_space<vmem>>, vector<8x32xf32>,
    %c40_51 = arith.constant 40 : index
    %c32_52 = arith.constant 32 : index
    %99 = vector.load %arg9[%c40_51, %c32_52] : memref<64x64xf32, #tpu.memory_space<vmem>>, vector<8x32xf32>
    tpu.vector_store %arg9[%c40_51, %c32_52], %97 {strides = array<i32>} : memref<64x64xf32, #tpu.memory_space<vmem>>, vector<8x32xf32>,
    %c40_53 = arith.constant 40 : index
    %c0_54 = arith.constant 0 : index
    %100 = vector.load %arg9[%c40_53, %c0_54] : memref<64x64xf32, #tpu.memory_space<vmem>>, vector<8x64xf32>
    %101 = arith.truncf %100 : vector<8x64xf32> to vector<8x64xbf16>
    %cst_55 = arith.constant dense<0.000000e+00> : vector<8x64xf32>
    %102 = tpu.matmul %101, %6, %cst_55 {dimension_numbers = #tpu.dot_dimension_numbers<[1], [0], [0], [1], [0, 0, 1, 1], [], []>} : vector<8x64xbf16>, vector<64x64xbf16>, vector<8x64xf32> -> vector<8x64xf32>
    %103 = vector.extract_strided_slice %5 {offsets = [48, 0], sizes = [8, 32], strides = [1, 1]} : vector<64x32xf32> to vector<8x32xf32>
    %104 = vector.extract_strided_slice %102 {offsets = [0, 0], sizes = [8, 32], strides = [1, 1]} : vector<8x64xf32> to vector<8x32xf32>
    %105 = arith.addf %103, %104 : vector<8x32xf32>
    %106 = math.tanh %105 : vector<8x32xf32>
    %107 = arith.truncf %106 : vector<8x32xf32> to vector<8x32xbf16>
    %cst_56 = arith.constant dense<0.000000e+00> : vector<8x32xf32>
    %108 = tpu.matmul %107, %7, %cst_56 {dimension_numbers = #tpu.dot_dimension_numbers<[1], [0], [0], [1], [0, 0, 1, 1], [], []>} : vector<8x32xbf16>, vector<32x32xbf16>, vector<8x32xf32> -> vector<8x32xf32>
    %109 = arith.addf %108, %10 : vector<8x32xf32>
    %110 = vector.extract_strided_slice %102 {offsets = [0, 32], sizes = [8, 32], strides = [1, 1]} : vector<8x64xf32> to vector<8x32xf32>
    %111 = arith.addf %109, %110 : vector<8x32xf32>
    %112 = math.tanh %111 : vector<8x32xf32>
    %c48 = arith.constant 48 : index
    %c0_57 = arith.constant 0 : index
    %113 = vector.load %arg9[%c48, %c0_57] : memref<64x64xf32, #tpu.memory_space<vmem>>, vector<8x32xf32>
    tpu.vector_store %arg9[%c48, %c0_57], %106 {strides = array<i32>} : memref<64x64xf32, #tpu.memory_space<vmem>>, vector<8x32xf32>,
    %c48_58 = arith.constant 48 : index
    %c32_59 = arith.constant 32 : index
    %114 = vector.load %arg9[%c48_58, %c32_59] : memref<64x64xf32, #tpu.memory_space<vmem>>, vector<8x32xf32>
    tpu.vector_store %arg9[%c48_58, %c32_59], %112 {strides = array<i32>} : memref<64x64xf32, #tpu.memory_space<vmem>>, vector<8x32xf32>,
    %c48_60 = arith.constant 48 : index
    %c0_61 = arith.constant 0 : index
    %115 = vector.load %arg9[%c48_60, %c0_61] : memref<64x64xf32, #tpu.memory_space<vmem>>, vector<8x64xf32>
    %116 = arith.truncf %115 : vector<8x64xf32> to vector<8x64xbf16>
    %cst_62 = arith.constant dense<0.000000e+00> : vector<8x64xf32>
    %117 = tpu.matmul %116, %6, %cst_62 {dimension_numbers = #tpu.dot_dimension_numbers<[1], [0], [0], [1], [0, 0, 1, 1], [], []>} : vector<8x64xbf16>, vector<64x64xbf16>, vector<8x64xf32> -> vector<8x64xf32>
    %118 = vector.extract_strided_slice %5 {offsets = [56, 0], sizes = [8, 32], strides = [1, 1]} : vector<64x32xf32> to vector<8x32xf32>
    %119 = vector.extract_strided_slice %117 {offsets = [0, 0], sizes = [8, 32], strides = [1, 1]} : vector<8x64xf32> to vector<8x32xf32>
    %120 = arith.addf %118, %119 : vector<8x32xf32>
    %121 = math.tanh %120 : vector<8x32xf32>
    %122 = arith.truncf %121 : vector<8x32xf32> to vector<8x32xbf16>
    %cst_63 = arith.constant dense<0.000000e+00> : vector<8x32xf32>
    %123 = tpu.matmul %122, %7, %cst_63 {dimension_numbers = #tpu.dot_dimension_numbers<[1], [0], [0], [1], [0, 0, 1, 1], [], []>} : vector<8x32xbf16>, vector<32x32xbf16>, vector<8x32xf32> -> vector<8x32xf32>
    %124 = arith.addf %123, %10 : vector<8x32xf32>
    %125 = vector.extract_strided_slice %117 {offsets = [0, 32], sizes = [8, 32], strides = [1, 1]} : vector<8x64xf32> to vector<8x32xf32>
    %126 = arith.addf %124, %125 : vector<8x32xf32>
    %127 = math.tanh %126 : vector<8x32xf32>
    %c56 = arith.constant 56 : index
    %c0_64 = arith.constant 0 : index
    %128 = vector.load %arg9[%c56, %c0_64] : memref<64x64xf32, #tpu.memory_space<vmem>>, vector<8x32xf32>
    tpu.vector_store %arg9[%c56, %c0_64], %121 {strides = array<i32>} : memref<64x64xf32, #tpu.memory_space<vmem>>, vector<8x32xf32>,
    %c56_65 = arith.constant 56 : index
    %c32_66 = arith.constant 32 : index
    %129 = vector.load %arg9[%c56_65, %c32_66] : memref<64x64xf32, #tpu.memory_space<vmem>>, vector<8x32xf32>
    tpu.vector_store %arg9[%c56_65, %c32_66], %127 {strides = array<i32>} : memref<64x64xf32, #tpu.memory_space<vmem>>, vector<8x32xf32>,
    %c0_67 = arith.constant 0 : index
    %c0_68 = arith.constant 0 : index
    %130 = vector.load %arg9[%c0_67, %c0_68] : memref<64x64xf32, #tpu.memory_space<vmem>>, vector<64x64xf32>
    %131 = arith.truncf %130 : vector<64x64xf32> to vector<64x64xbf16>
    %c0_69 = arith.constant 0 : index
    %c0_70 = arith.constant 0 : index
    %132 = vector.load %arg6[%c0_69, %c0_70] : memref<64x12xbf16, #tpu.memory_space<vmem>>, vector<64x12xbf16>
    %cst_71 = arith.constant dense<0.000000e+00> : vector<64x12xf32>
    %133 = tpu.matmul %131, %132, %cst_71 {dimension_numbers = #tpu.dot_dimension_numbers<[1], [0], [0], [1], [0, 0, 1, 1], [], []>} : vector<64x64xbf16>, vector<64x12xbf16>, vector<64x12xf32> -> vector<64x12xf32>
    %c0_72 = arith.constant 0 : index
    %c0_73 = arith.constant 0 : index
    %134 = vector.load %arg7[%c0_72, %c0_73] : memref<1x12xf32, #tpu.memory_space<vmem>>, vector<1x12xf32>
    %135 = vector.broadcast %134 : vector<1x12xf32> to vector<64x12xf32>
    %136 = arith.addf %133, %135 : vector<64x12xf32>
    %c0_74 = arith.constant 0 : index
    %c0_75 = arith.constant 0 : index
    %137 = vector.load %arg8[%c0_74, %c0_75] : memref<64x12xf32, #tpu.memory_space<vmem>>, vector<64x12xf32>
    tpu.vector_store %arg8[%c0_74, %c0_75], %136 {strides = array<i32>} : memref<64x12xf32, #tpu.memory_space<vmem>>, vector<64x12xf32>,
    return
  }
}

</mosaic_0001>

<llo_original>
// kernel: drnn_forward.1
$region0: #{drnn_forward.1}
  #allocation0 [shape = 'u32[]', space=smem, size = 0x4, offset = 0x4, fixed_abs, tag = 'smem constant byte address 0x4 - core index']
  #allocation1 [shape = 'u32[72,128]{1,0:T(1,128)}', space=vmem, size = 0x9000, scoped, tag = 'internal scratch']
  #allocation2 [shape = 'f32[64,64]{1,0:T(8,128)}', space=vmem, size = 0x8000, scoped, tag = 'scratch operand']
  %s0 = inlined_call_operand.vmem [shape: bf16[64,24], index: 0, kind: input, shape index: {}]
  %s1 = inlined_call_operand.vmem [shape: bf16[24,32], index: 1, kind: input, shape index: {}]
  %s2 = inlined_call_operand.vmem [shape: f32[1,32], index: 2, kind: input, shape index: {}]
  %s3 = inlined_call_operand.vmem [shape: bf16[64,64], index: 3, kind: input, shape index: {}]
  %s4 = inlined_call_operand.vmem [shape: bf16[32,32], index: 4, kind: input, shape index: {}]
  %s5 = inlined_call_operand.vmem [shape: f32[1,32], index: 5, kind: input, shape index: {}]
  %s6 = inlined_call_operand.vmem [shape: bf16[64,12], index: 6, kind: input, shape index: {}]
  %s7 = inlined_call_operand.vmem [shape: f32[1,12], index: 7, kind: input, shape index: {}]
  %s8 = inlined_call_operand.vmem [shape: f32[64,12], index: 8, kind: output, shape index: {}]
  %s9 = sld [smem:[#allocation0]]
  $region42: #{drnn_forward.1} parent=0
    _
  %s11 = ssub.s32 1, %s9
  %s12 = scalar_select 0, %s11, %s9
  // Predicated region
  $region2: #{drnn_forward.1} parent=0 // pred_check
    _
  $region3: #{drnn_forward.1} parent=0 // pred_check_branch
    %14 = sbr.rel (0) target = $region5
  $region4: #{drnn_forward.1} parent=0 // pred_region
    _
  $region5: #{drnn_forward.1} parent=0 // pred_fallthru
    _
  // Predicated region
  $region6: #{drnn_forward.1} parent=0 // pred_check
    _
  $region7: #{drnn_forward.1} parent=0 // pred_check_branch
    %16 = sbr.rel (0) target = $region9
  $region8: #{drnn_forward.1} parent=0 // pred_region
    _
  $region9: #{drnn_forward.1} parent=0 // pred_fallthru
    _
  // Predicated region
  $region10: #{drnn_forward.1} parent=0 // pred_check
    _
  $region11: #{drnn_forward.1} parent=0 // pred_check_branch
    %18 = sbr.rel (0) target = $region13
  $region12: #{drnn_forward.1} parent=0 // pred_region
    _
  $region13: #{drnn_forward.1} parent=0 // pred_fallthru
    _
  // Predicated region
  $region14: #{drnn_forward.1} parent=0 // pred_check
    _
  $region15: #{drnn_forward.1} parent=0 // pred_check_branch
    %20 = sbr.rel (0) target = $region17
  $region16: #{drnn_forward.1} parent=0 // pred_region
    _
  $region17: #{drnn_forward.1} parent=0 // pred_fallthru
    _
  // Predicated region
  $region18: #{drnn_forward.1} parent=0 // pred_check
    _
  $region19: #{drnn_forward.1} parent=0 // pred_check_branch
    %22 = sbr.rel (0) target = $region21
  $region20: #{drnn_forward.1} parent=0 // pred_region
    _
  $region21: #{drnn_forward.1} parent=0 // pred_fallthru
    _
  // Predicated region
  $region22: #{drnn_forward.1} parent=0 // pred_check
    _
  $region23: #{drnn_forward.1} parent=0 // pred_check_branch
    %24 = sbr.rel (0) target = $region25
  $region24: #{drnn_forward.1} parent=0 // pred_region
    _
  $region25: #{drnn_forward.1} parent=0 // pred_fallthru
    _
  // Predicated region
  $region26: #{drnn_forward.1} parent=0 // pred_check
    _
  $region27: #{drnn_forward.1} parent=0 // pred_check_branch
    %26 = sbr.rel (0) target = $region29
  $region28: #{drnn_forward.1} parent=0 // pred_region
    _
  $region29: #{drnn_forward.1} parent=0 // pred_fallthru
    _
  // Predicated region
  $region30: #{drnn_forward.1} parent=0 // pred_check
    _
  $region31: #{drnn_forward.1} parent=0 // pred_check_branch
    %28 = sbr.rel (0) target = $region33
  $region32: #{drnn_forward.1} parent=0 // pred_region
    _
  $region33: #{drnn_forward.1} parent=0 // pred_fallthru
    _
  %v30 = vld [vmem:[%s0] sm:$0xf]
  %v31 = vld [vmem:[%s0 + $0x4] sm:$0xf]
  %v32 = vld [vmem:[%s0 + $0x8] sm:$0xf]
  %v33 = vld [vmem:[%s0 + $0xc] sm:$0xf]
  %v34 = vld [vmem:[%s0 + $0x10] sm:$0xf]
  %v35 = vld [vmem:[%s0 + $0x14] sm:$0xf]
  %v36 = vld [vmem:[%s0 + $0x18] sm:$0xf]
  %v37 = vld [vmem:[%s0 + $0x1c] sm:$0xf]
  %v38 = vld [vmem:[%s1] sm:$0xf]
  %v39 = vld [vmem:[%s1 + $0x4] sm:$0xf]
  %v40 = vld [vmem:[%s1 + $0x8] sm:$0xf]
  %v41 = vld [vmem:[%s2] sm:$0x1]
  %v43 = vperm.slane %v41, 0
  %v53 = vunpack.c.l.b16 %v30
  %v54 = vunpack.c.l.b16 %v31
  %v55 = vunpack.c.l.b16 %v32
  %v56 = vunpack.c.l.b16 %v33
  %v57 = vunpack.c.l.b16 %v34
  %v58 = vunpack.c.l.b16 %v35
  %v59 = vunpack.c.l.b16 %v36
  %v60 = vunpack.c.l.b16 %v37
  %v61 = vpack.c.b16 %v54, %v53
  %v62 = vpack.c.b16 %v56, %v55
  %v63 = vpack.c.b16 %v58, %v57
  %v64 = vpack.c.b16 %v60, %v59
  %v68 = vunpack.c.l.b16 %v38
  %v69 = vunpack.c.l.b16 %v39
  %v70 = vunpack.c.l.b16 %v40
  %v71 = vpack.c.b16 %v69, %v68
  %v72 = vpack.c.b16 %v70, %v70
  %vm74 = vcmask 195584
  %v76 = vsel %vm74, %v61, 0
  %v79 = vsel %vm74, %v62, 0
  %v82 = vsel %vm74, %v63, 0
  %v85 = vsel %vm74, %v64, 0
  %vm87 = vcmask 1043456
  %v89 = vsel %vm87, %v72, 0
  %91 = vmatpush.bf16.msra.mxu0 0
  %92 = vmatpush.bf16.msra.mxu0 0
  %93 = vmatpush.bf16.msra.mxu0 0
  %94 = vmatpush.bf16.msra.mxu0 0
  %95 = vmatpush.bf16.msra.mxu0 0
  %96 = vmatpush.bf16.msra.mxu0 0
  %97 = vmatpush.bf16.msra.mxu0 %v89
  %98 = vmatpush.bf16.msra.mxu0 %v71
  %99 = vmatmul.bf16.gmra.mxu0 %v76
  %v100 = vpop.f32.mrf.mxu0
  %v101 = vadd.f32 %v43, %v100
  %v102 = vpop.f32.mrf.mxu0
  %v103 = vadd.f32 %v43, %v102
  %104 = vmatmul.bf16.gmra.mxu0 %v79
  %v105 = vpop.f32.mrf.mxu0
  %v106 = vadd.f32 %v43, %v105
  %v107 = vpop.f32.mrf.mxu0
  %v108 = vadd.f32 %v43, %v107
  %109 = vmatmul.bf16.gmra.mxu0 %v82
  %v110 = vpop.f32.mrf.mxu0
  %v111 = vadd.f32 %v43, %v110
  %v112 = vpop.f32.mrf.mxu0
  %v113 = vadd.f32 %v43, %v112
  %114 = vmatmul.bf16.gmra.mxu0 %v85
  %v115 = vpop.f32.mrf.mxu0
  %v116 = vadd.f32 %v43, %v115
  %v117 = vpop.f32.mrf.mxu0
  %v118 = vadd.f32 %v43, %v117
  %119 = vdwg.mxu0
  %v120 = vld [vmem:[%s3] sm:$0xf]
  %v121 = vld [vmem:[%s3 + $0x4] sm:$0xf]
  %v122 = vld [vmem:[%s3 + $0x8] sm:$0xf]
  %v123 = vld [vmem:[%s3 + $0xc] sm:$0xf]
  %v124 = vld [vmem:[%s3 + $0x10] sm:$0xf]
  %v125 = vld [vmem:[%s3 + $0x14] sm:$0xf]
  %v126 = vld [vmem:[%s3 + $0x18] sm:$0xf]
  %v127 = vld [vmem:[%s3 + $0x1c] sm:$0xf]
  %v128 = vld [vmem:[%s4] sm:$0xf]
  %v129 = vld [vmem:[%s4 + $0x4] sm:$0xf]
  %v130 = vld [vmem:[%s4 + $0x8] sm:$0xf]
  %v131 = vld [vmem:[%s4 + $0xc] sm:$0xf]
  %v132 = vld [vmem:[%s5] sm:$0x1]
  %v134 = vperm.slane %v132, 0
  %v144 = vunpack.c.l.b16 %v120
  %v145 = vunpack.c.l.b16 %v121
  %v146 = vunpack.c.l.b16 %v122
  %v147 = vunpack.c.l.b16 %v123
  %v148 = vunpack.c.l.b16 %v124
  %v149 = vunpack.c.l.b16 %v125
  %v150 = vunpack.c.l.b16 %v126
  %v151 = vunpack.c.l.b16 %v127
  %v152 = vpack.c.b16 %v145, %v144
  %v153 = vpack.c.b16 %v147, %v146
  %v154 = vpack.c.b16 %v149, %v148
  %v155 = vpack.c.b16 %v151, %v150
  %vm160 = vcmask 523264
  %v162 = vsel %vm160, 0, 0
  %164 = vmatpush.bf16.msra.mxu0 0
  %165 = vmatpush.bf16.msra.mxu0 0
  %166 = vmatpush.bf16.msra.mxu0 0
  %167 = vmatpush.bf16.msra.mxu0 0
  %168 = vmatpush.bf16.msra.mxu0 %v155
  %169 = vmatpush.bf16.msra.mxu0 %v154
  %170 = vmatpush.bf16.msra.mxu0 %v153
  %171 = vmatpush.bf16.msra.mxu0 %v152
  %172 = vmatmul.bf16.gmra.mxu0 %v162
  %v173 = vpop.f32.mrf.mxu0
  %v174 = vadd.f32 0.0, %v173
  %v175 = vpop.f32.mrf.mxu0
  %176 = vdwg.mxu0
  %v177 = vadd.f32 %v101, %v174
  %v178 = vtanh.pop %v177
  %v179 = vpack.c.bf16 %v178, %v178
  %v184 = vunpack.c.l.b16 %v128
  %v185 = vunpack.c.l.b16 %v129
  %v186 = vunpack.c.l.b16 %v130
  %v187 = vunpack.c.l.b16 %v131
  %v188 = vpack.c.b16 %v185, %v184
  %v189 = vpack.c.b16 %v187, %v186
  %vm192 = vcmask 261120
  %v194 = vsel %vm192, %v179, 0
  %196 = vmatpush.bf16.msra.mxu0 0
  %197 = vmatpush.bf16.msra.mxu0 0
  %198 = vmatpush.bf16.msra.mxu0 0
  %199 = vmatpush.bf16.msra.mxu0 0
  %200 = vmatpush.bf16.msra.mxu0 0
  %201 = vmatpush.bf16.msra.mxu0 0
  %202 = vmatpush.bf16.msra.mxu0 %v189
  %203 = vmatpush.bf16.msra.mxu0 %v188
  %204 = vmatmul.bf16.gmra.mxu0 %v194
  %v205 = vpop.f32.mrf.mxu0
  %v206 = vadd.f32 %v134, %v205
  %v207 = vpop.f32.mrf.mxu0
  %208 = vdwg.mxu0
  %210 = vrot.lane.b32.xlu0 %v174, 96
  %v211 = vpop.permute.xlu0 %210
  %v213 = vadd.f32 %v206, %v211
  %v214 = vtanh.pop %v213
  %215 = vst.msk [vmem:[#allocation2] sm:$0xff] %vm192, %v178
  %217 = vrot.lane.b32.xlu0 %v214, 32
  %v218 = vpop.permute.xlu0 %217
  %vm220 = vcmask 523520
  %221 = vst.msk [vmem:[#allocation2] sm:$0xff] %vm220, %v218
  %v222 = vld [vmem:[#allocation2] sm:$0xff]
  %v223 = vpack.c.bf16 %v222, %v222
  %v225 = vsel %vm160, %v223, 0
  %227 = vmatpush.bf16.msra.mxu0 0
  %228 = vmatpush.bf16.msra.mxu0 0
  %229 = vmatpush.bf16.msra.mxu0 0
  %230 = vmatpush.bf16.msra.mxu0 0
  %231 = vmatpush.bf16.msra.mxu0 %v155
  %232 = vmatpush.bf16.msra.mxu0 %v154
  %233 = vmatpush.bf16.msra.mxu0 %v153
  %234 = vmatpush.bf16.msra.mxu0 %v152
  %235 = vmatmul.bf16.gmra.mxu0 %v225
  %v236 = vpop.f32.mrf.mxu0
  %v237 = vadd.f32 0.0, %v236
  %v238 = vpop.f32.mrf.mxu0
  %239 = vdwg.mxu0
  %v240 = vadd.f32 %v103, %v237
  %v241 = vtanh.pop %v240
  %v242 = vpack.c.bf16 %v241, %v241
  %v244 = vsel %vm192, %v242, 0
  %246 = vmatpush.bf16.msra.mxu0 0
  %247 = vmatpush.bf16.msra.mxu0 0
  %248 = vmatpush.bf16.msra.mxu0 0
  %249 = vmatpush.bf16.msra.mxu0 0
  %250 = vmatpush.bf16.msra.mxu0 0
  %251 = vmatpush.bf16.msra.mxu0 0
  %252 = vmatpush.bf16.msra.mxu0 %v189
  %253 = vmatpush.bf16.msra.mxu0 %v188
  %254 = vmatmul.bf16.gmra.mxu0 %v244
  %v255 = vpop.f32.mrf.mxu0
  %v256 = vadd.f32 %v134, %v255
  %v257 = vpop.f32.mrf.mxu0
  %258 = vdwg.mxu0
  %260 = vrot.lane.b32.xlu0 %v237, 96
  %v261 = vpop.permute.xlu0 %260
  %v263 = vadd.f32 %v256, %v261
  %v264 = vtanh.pop %v263
  %265 = vst.msk [vmem:[#allocation2 + $0x8] sm:$0xff] %vm192, %v241
  %267 = vrot.lane.b32.xlu0 %v264, 32
  %v268 = vpop.permute.xlu0 %267
  %270 = vst.msk [vmem:[#allocation2 + $0x8] sm:$0xff] %vm220, %v268
  %v271 = vld [vmem:[#allocation2 + $0x8] sm:$0xff]
  %v272 = vpack.c.bf16 %v271, %v271
  %v274 = vsel %vm160, %v272, 0
  %276 = vmatpush.bf16.msra.mxu0 0
  %277 = vmatpush.bf16.msra.mxu0 0
  %278 = vmatpush.bf16.msra.mxu0 0
  %279 = vmatpush.bf16.msra.mxu0 0
  %280 = vmatpush.bf16.msra.mxu0 %v155
  %281 = vmatpush.bf16.msra.mxu0 %v154
  %282 = vmatpush.bf16.msra.mxu0 %v153
  %283 = vmatpush.bf16.msra.mxu0 %v152
  %284 = vmatmul.bf16.gmra.mxu0 %v274
  %v285 = vpop.f32.mrf.mxu0
  %v286 = vadd.f32 0.0, %v285
  %v287 = vpop.f32.mrf.mxu0
  %288 = vdwg.mxu0
  %v289 = vadd.f32 %v106, %v286
  %v290 = vtanh.pop %v289
  %v291 = vpack.c.bf16 %v290, %v290
  %v293 = vsel %vm192, %v291, 0
  %295 = vmatpush.bf16.msra.mxu0 0
  %296 = vmatpush.bf16.msra.mxu0 0
  %297 = vmatpush.bf16.msra.mxu0 0
  %298 = vmatpush.bf16.msra.mxu0 0
  %299 = vmatpush.bf16.msra.mxu0 0
  %300 = vmatpush.bf16.msra.mxu0 0
  %301 = vmatpush.bf16.msra.mxu0 %v189
  %302 = vmatpush.bf16.msra.mxu0 %v188
  %303 = vmatmul.bf16.gmra.mxu0 %v293
  %v304 = vpop.f32.mrf.mxu0
  %v305 = vadd.f32 %v134, %v304
  %v306 = vpop.f32.mrf.mxu0
  %307 = vdwg.mxu0
  %309 = vrot.lane.b32.xlu0 %v286, 96
  %v310 = vpop.permute.xlu0 %309
  %v312 = vadd.f32 %v305, %v310
  %v313 = vtanh.pop %v312
  %314 = vst.msk [vmem:[#allocation2 + $0x10] sm:$0xff] %vm192, %v290
  %316 = vrot.lane.b32.xlu0 %v313, 32
  %v317 = vpop.permute.xlu0 %316
  %319 = vst.msk [vmem:[#allocation2 + $0x10] sm:$0xff] %vm220, %v317
  %v320 = vld [vmem:[#allocation2 + $0x10] sm:$0xff]
  %v321 = vpack.c.bf16 %v320, %v320
  %v323 = vsel %vm160, %v321, 0
  %325 = vmatpush.bf16.msra.mxu0 0
  %326 = vmatpush.bf16.msra.mxu0 0
  %327 = vmatpush.bf16.msra.mxu0 0
  %328 = vmatpush.bf16.msra.mxu0 0
  %329 = vmatpush.bf16.msra.mxu0 %v155
  %330 = vmatpush.bf16.msra.mxu0 %v154
  %331 = vmatpush.bf16.msra.mxu0 %v153
  %332 = vmatpush.bf16.msra.mxu0 %v152
  %333 = vmatmul.bf16.gmra.mxu0 %v323
  %v334 = vpop.f32.mrf.mxu0
  %v335 = vadd.f32 0.0, %v334
  %v336 = vpop.f32.mrf.mxu0
  %337 = vdwg.mxu0
  %v338 = vadd.f32 %v108, %v335
  %v339 = vtanh.pop %v338
  %v340 = vpack.c.bf16 %v339, %v339
  %v342 = vsel %vm192, %v340, 0
  %344 = vmatpush.bf16.msra.mxu0 0
  %345 = vmatpush.bf16.msra.mxu0 0
  %346 = vmatpush.bf16.msra.mxu0 0
  %347 = vmatpush.bf16.msra.mxu0 0
  %348 = vmatpush.bf16.msra.mxu0 0
  %349 = vmatpush.bf16.msra.mxu0 0
  %350 = vmatpush.bf16.msra.mxu0 %v189
  %351 = vmatpush.bf16.msra.mxu0 %v188
  %352 = vmatmul.bf16.gmra.mxu0 %v342
  %v353 = vpop.f32.mrf.mxu0
  %v354 = vadd.f32 %v134, %v353
  %v355 = vpop.f32.mrf.mxu0
  %356 = vdwg.mxu0
  %358 = vrot.lane.b32.xlu0 %v335, 96
  %v359 = vpop.permute.xlu0 %358
  %v361 = vadd.f32 %v354, %v359
  %v362 = vtanh.pop %v361
  %363 = vst.msk [vmem:[#allocation2 + $0x18] sm:$0xff] %vm192, %v339
  %365 = vrot.lane.b32.xlu0 %v362, 32
  %v366 = vpop.permute.xlu0 %365
  %368 = vst.msk [vmem:[#allocation2 + $0x18] sm:$0xff] %vm220, %v366
  %v369 = vld [vmem:[#allocation2 + $0x18] sm:$0xff]
  %v370 = vpack.c.bf16 %v369, %v369
  %v372 = vsel %vm160, %v370, 0
  %374 = vmatpush.bf16.msra.mxu0 0
  %375 = vmatpush.bf16.msra.mxu0 0
  %376 = vmatpush.bf16.msra.mxu0 0
  %377 = vmatpush.bf16.msra.mxu0 0
  %378 = vmatpush.bf16.msra.mxu0 %v155
  %379 = vmatpush.bf16.msra.mxu0 %v154
  %380 = vmatpush.bf16.msra.mxu0 %v153
  %381 = vmatpush.bf16.msra.mxu0 %v152
  %382 = vmatmul.bf16.gmra.mxu0 %v372
  %v383 = vpop.f32.mrf.mxu0
  %v384 = vadd.f32 0.0, %v383
  %v385 = vpop.f32.mrf.mxu0
  %386 = vdwg.mxu0
  %v387 = vadd.f32 %v111, %v384
  %v388 = vtanh.pop %v387
  %v389 = vpack.c.bf16 %v388, %v388
  %v391 = vsel %vm192, %v389, 0
  %393 = vmatpush.bf16.msra.mxu0 0
  %394 = vmatpush.bf16.msra.mxu0 0
  %395 = vmatpush.bf16.msra.mxu0 0
  %396 = vmatpush.bf16.msra.mxu0 0
  %397 = vmatpush.bf16.msra.mxu0 0
  %398 = vmatpush.bf16.msra.mxu0 0
  %399 = vmatpush.bf16.msra.mxu0 %v189
  %400 = vmatpush.bf16.msra.mxu0 %v188
  %401 = vmatmul.bf16.gmra.mxu0 %v391
  %v402 = vpop.f32.mrf.mxu0
  %v403 = vadd.f32 %v134, %v402
  %v404 = vpop.f32.mrf.mxu0
  %405 = vdwg.mxu0
  %407 = vrot.lane.b32.xlu0 %v384, 96
  %v408 = vpop.permute.xlu0 %407
  %v410 = vadd.f32 %v403, %v408
  %v411 = vtanh.pop %v410
  %412 = vst.msk [vmem:[#allocation2 + $0x20] sm:$0xff] %vm192, %v388
  %414 = vrot.lane.b32.xlu0 %v411, 32
  %v415 = vpop.permute.xlu0 %414
  %417 = vst.msk [vmem:[#allocation2 + $0x20] sm:$0xff] %vm220, %v415
  %v418 = vld [vmem:[#allocation2 + $0x20] sm:$0xff]
  %v419 = vpack.c.bf16 %v418, %v418
  %v421 = vsel %vm160, %v419, 0
  %423 = vmatpush.bf16.msra.mxu0 0
  %424 = vmatpush.bf16.msra.mxu0 0
  %425 = vmatpush.bf16.msra.mxu0 0
  %426 = vmatpush.bf16.msra.mxu0 0
  %427 = vmatpush.bf16.msra.mxu0 %v155
  %428 = vmatpush.bf16.msra.mxu0 %v154
  %429 = vmatpush.bf16.msra.mxu0 %v153
  %430 = vmatpush.bf16.msra.mxu0 %v152
  %431 = vmatmul.bf16.gmra.mxu0 %v421
  %v432 = vpop.f32.mrf.mxu0
  %v433 = vadd.f32 0.0, %v432
  %v434 = vpop.f32.mrf.mxu0
  %435 = vdwg.mxu0
  %v436 = vadd.f32 %v113, %v433
  %v437 = vtanh.pop %v436
  %v438 = vpack.c.bf16 %v437, %v437
  %v440 = vsel %vm192, %v438, 0
  %442 = vmatpush.bf16.msra.mxu0 0
  %443 = vmatpush.bf16.msra.mxu0 0
  %444 = vmatpush.bf16.msra.mxu0 0
  %445 = vmatpush.bf16.msra.mxu0 0
  %446 = vmatpush.bf16.msra.mxu0 0
  %447 = vmatpush.bf16.msra.mxu0 0
  %448 = vmatpush.bf16.msra.mxu0 %v189
  %449 = vmatpush.bf16.msra.mxu0 %v188
  %450 = vmatmul.bf16.gmra.mxu0 %v440
  %v451 = vpop.f32.mrf.mxu0
  %v452 = vadd.f32 %v134, %v451
  %v453 = vpop.f32.mrf.mxu0
  %454 = vdwg.mxu0
  %456 = vrot.lane.b32.xlu0 %v433, 96
  %v457 = vpop.permute.xlu0 %456
  %v459 = vadd.f32 %v452, %v457
  %v460 = vtanh.pop %v459
  %461 = vst.msk [vmem:[#allocation2 + $0x28] sm:$0xff] %vm192, %v437
  %463 = vrot.lane.b32.xlu0 %v460, 32
  %v464 = vpop.permute.xlu0 %463
  %466 = vst.msk [vmem:[#allocation2 + $0x28] sm:$0xff] %vm220, %v464
  %v467 = vld [vmem:[#allocation2 + $0x28] sm:$0xff]
  %v468 = vpack.c.bf16 %v467, %v467
  %v470 = vsel %vm160, %v468, 0
  %472 = vmatpush.bf16.msra.mxu0 0
  %473 = vmatpush.bf16.msra.mxu0 0
  %474 = vmatpush.bf16.msra.mxu0 0
  %475 = vmatpush.bf16.msra.mxu0 0
  %476 = vmatpush.bf16.msra.mxu0 %v155
  %477 = vmatpush.bf16.msra.mxu0 %v154
  %478 = vmatpush.bf16.msra.mxu0 %v153
  %479 = vmatpush.bf16.msra.mxu0 %v152
  %480 = vmatmul.bf16.gmra.mxu0 %v470
  %v481 = vpop.f32.mrf.mxu0
  %v482 = vadd.f32 0.0, %v481
  %v483 = vpop.f32.mrf.mxu0
  %484 = vdwg.mxu0
  %v485 = vadd.f32 %v116, %v482
  %v486 = vtanh.pop %v485
  %v487 = vpack.c.bf16 %v486, %v486
  %v489 = vsel %vm192, %v487, 0
  %491 = vmatpush.bf16.msra.mxu0 0
  %492 = vmatpush.bf16.msra.mxu0 0
  %493 = vmatpush.bf16.msra.mxu0 0
  %494 = vmatpush.bf16.msra.mxu0 0
  %495 = vmatpush.bf16.msra.mxu0 0
  %496 = vmatpush.bf16.msra.mxu0 0
  %497 = vmatpush.bf16.msra.mxu0 %v189
  %498 = vmatpush.bf16.msra.mxu0 %v188
  %499 = vmatmul.bf16.gmra.mxu0 %v489
  %v500 = vpop.f32.mrf.mxu0
  %v501 = vadd.f32 %v134, %v500
  %v502 = vpop.f32.mrf.mxu0
  %503 = vdwg.mxu0
  %505 = vrot.lane.b32.xlu0 %v482, 96
  %v506 = vpop.permute.xlu0 %505
  %v508 = vadd.f32 %v501, %v506
  %v509 = vtanh.pop %v508
  %510 = vst.msk [vmem:[#allocation2 + $0x30] sm:$0xff] %vm192, %v486
  %512 = vrot.lane.b32.xlu0 %v509, 32
  %v513 = vpop.permute.xlu0 %512
  %515 = vst.msk [vmem:[#allocation2 + $0x30] sm:$0xff] %vm220, %v513
  %v516 = vld [vmem:[#allocation2 + $0x30] sm:$0xff]
  %v517 = vpack.c.bf16 %v516, %v516
  %v519 = vsel %vm160, %v517, 0
  %521 = vmatpush.bf16.msra.mxu0 0
  %522 = vmatpush.bf16.msra.mxu0 0
  %523 = vmatpush.bf16.msra.mxu0 0
  %524 = vmatpush.bf16.msra.mxu0 0
  %525 = vmatpush.bf16.msra.mxu0 %v155
  %526 = vmatpush.bf16.msra.mxu0 %v154
  %527 = vmatpush.bf16.msra.mxu0 %v153
  %528 = vmatpush.bf16.msra.mxu0 %v152
  %529 = vmatmul.bf16.gmra.mxu0 %v519
  %v530 = vpop.f32.mrf.mxu0
  %v531 = vadd.f32 0.0, %v530
  %v532 = vpop.f32.mrf.mxu0
  %533 = vdwg.mxu0
  %v534 = vadd.f32 %v118, %v531
  %v535 = vtanh.pop %v534
  %v536 = vpack.c.bf16 %v535, %v535
  %v538 = vsel %vm192, %v536, 0
  %540 = vmatpush.bf16.msra.mxu0 0
  %541 = vmatpush.bf16.msra.mxu0 0
  %542 = vmatpush.bf16.msra.mxu0 0
  %543 = vmatpush.bf16.msra.mxu0 0
  %544 = vmatpush.bf16.msra.mxu0 0
  %545 = vmatpush.bf16.msra.mxu0 0
  %546 = vmatpush.bf16.msra.mxu0 %v189
  %547 = vmatpush.bf16.msra.mxu0 %v188
  %548 = vmatmul.bf16.gmra.mxu0 %v538
  %v549 = vpop.f32.mrf.mxu0
  %v550 = vadd.f32 %v134, %v549
  %v551 = vpop.f32.mrf.mxu0
  %552 = vdwg.mxu0
  %554 = vrot.lane.b32.xlu0 %v531, 96
  %v555 = vpop.permute.xlu0 %554
  %v557 = vadd.f32 %v550, %v555
  %v558 = vtanh.pop %v557
  %559 = vst.msk [vmem:[#allocation2 + $0x38] sm:$0xff] %vm192, %v535
  %561 = vrot.lane.b32.xlu0 %v558, 32
  %v562 = vpop.permute.xlu0 %561
  %564 = vst.msk [vmem:[#allocation2 + $0x38] sm:$0xff] %vm220, %v562
  %v565 = vld [vmem:[#allocation2] sm:$0xff]
  %v566 = vld [vmem:[#allocation2 + $0x8] sm:$0xff]
  %v567 = vld [vmem:[#allocation2 + $0x10] sm:$0xff]
  %v568 = vld [vmem:[#allocation2 + $0x18] sm:$0xff]
  %v569 = vld [vmem:[#allocation2 + $0x20] sm:$0xff]
  %v570 = vld [vmem:[#allocation2 + $0x28] sm:$0xff]
  %v571 = vld [vmem:[#allocation2 + $0x30] sm:$0xff]
  %v572 = vld [vmem:[#allocation2 + $0x38] sm:$0xff]
  %v573 = vpack.c.bf16 %v566, %v565
  %v574 = vpack.c.bf16 %v568, %v567
  %v575 = vpack.c.bf16 %v570, %v569
  %v576 = vpack.c.bf16 %v572, %v571
  %v577 = vld [vmem:[%s6] sm:$0xf]
  %v578 = vld [vmem:[%s6 + $0x4] sm:$0xf]
  %v579 = vld [vmem:[%s6 + $0x8] sm:$0xf]
  %v580 = vld [vmem:[%s6 + $0xc] sm:$0xf]
  %v581 = vld [vmem:[%s6 + $0x10] sm:$0xf]
  %v582 = vld [vmem:[%s6 + $0x14] sm:$0xf]
  %v583 = vld [vmem:[%s6 + $0x18] sm:$0xf]
  %v584 = vld [vmem:[%s6 + $0x1c] sm:$0xf]
  %v585 = vld [vmem:[%s7] sm:$0x1]
  %v587 = vperm.slane %v585, 0
  %v597 = vunpack.c.l.b16 %v577
  %v598 = vunpack.c.l.b16 %v578
  %v599 = vunpack.c.l.b16 %v579
  %v600 = vunpack.c.l.b16 %v580
  %v601 = vunpack.c.l.b16 %v581
  %v602 = vunpack.c.l.b16 %v582
  %v603 = vunpack.c.l.b16 %v583
  %v604 = vunpack.c.l.b16 %v584
  %v605 = vpack.c.b16 %v598, %v597
  %v606 = vpack.c.b16 %v600, %v599
  %v607 = vpack.c.b16 %v602, %v601
  %v608 = vpack.c.b16 %v604, %v603
  %v614 = vsel %vm160, %v573, 0
  %v617 = vsel %vm160, %v574, 0
  %v620 = vsel %vm160, %v575, 0
  %v623 = vsel %vm160, %v576, 0
  %625 = vmatpush.bf16.msra.mxu0 0
  %626 = vmatpush.bf16.msra.mxu0 0
  %627 = vmatpush.bf16.msra.mxu0 0
  %628 = vmatpush.bf16.msra.mxu0 0
  %629 = vmatpush.bf16.msra.mxu0 %v608
  %630 = vmatpush.bf16.msra.mxu0 %v607
  %631 = vmatpush.bf16.msra.mxu0 %v606
  %632 = vmatpush.bf16.msra.mxu0 %v605
  %633 = vmatmul.bf16.gmra.mxu0 %v614
  %v634 = vpop.f32.mrf.mxu0
  %v635 = vadd.f32 %v587, %v634
  %v636 = vpop.f32.mrf.mxu0
  %v637 = vadd.f32 %v587, %v636
  %638 = vmatmul.bf16.gmra.mxu0 %v617
  %v639 = vpop.f32.mrf.mxu0
  %v640 = vadd.f32 %v587, %v639
  %v641 = vpop.f32.mrf.mxu0
  %v642 = vadd.f32 %v587, %v641
  %643 = vmatmul.bf16.gmra.mxu0 %v620
  %v644 = vpop.f32.mrf.mxu0
  %v645 = vadd.f32 %v587, %v644
  %v646 = vpop.f32.mrf.mxu0
  %v647 = vadd.f32 %v587, %v646
  %648 = vmatmul.bf16.gmra.mxu0 %v623
  %v649 = vpop.f32.mrf.mxu0
  %v650 = vadd.f32 %v587, %v649
  %v651 = vpop.f32.mrf.mxu0
  %v652 = vadd.f32 %v587, %v651
  %653 = vdwg.mxu0
  %vm654 = vcmask 97280
  %655 = vst.msk [vmem:[%s8] sm:$0xff] %vm654, %v635
  %656 = vst.msk [vmem:[%s8 + $0x8] sm:$0xff] %vm654, %v637
  %657 = vst.msk [vmem:[%s8 + $0x10] sm:$0xff] %vm654, %v640
  %658 = vst.msk [vmem:[%s8 + $0x18] sm:$0xff] %vm654, %v642
  %659 = vst.msk [vmem:[%s8 + $0x20] sm:$0xff] %vm654, %v645
  %660 = vst.msk [vmem:[%s8 + $0x28] sm:$0xff] %vm654, %v647
  %661 = vst.msk [vmem:[%s8 + $0x30] sm:$0xff] %vm654, %v650
  %662 = vst.msk [vmem:[%s8 + $0x38] sm:$0xff] %vm654, %v652
  // Predicated region
  $region34: #{drnn_forward.1} parent=0 // pred_check
    _
  $region35: #{drnn_forward.1} parent=0 // pred_check_branch
    %664 = sbr.rel (0) target = $region37
  $region36: #{drnn_forward.1} parent=0 // pred_region
    _
  $region37: #{drnn_forward.1} parent=0 // pred_fallthru
    _
  // Predicated region
  $region38: #{drnn_forward.1} parent=0 // pred_check
    _
  $region39: #{drnn_forward.1} parent=0 // pred_check_branch
    %666 = sbr.rel (0) target = $region41
  $region40: #{drnn_forward.1} parent=0 // pred_region
    _
  $region41: #{drnn_forward.1} parent=0 // pred_fallthru
    _

</llo_original>
